<compile_context>
chip_gen: v6e
topology: v6e:2x2x1
jax: 0.10.0
libtpu: 0.0.40
codegen_flags: <defaults>
</compile_context>

<pallas_src>
import functools

import numpy as np

import jax
import jax.numpy as jnp
from jax.experimental import pallas as pl
from jax.experimental.pallas import tpu as pltpu


# --------------------------------------------------------------------------
# Noise schedule (host-side numpy, same math as make_beta_schedule('linear'))
# --------------------------------------------------------------------------
def make_linear_beta_schedule(n_timestep, linear_start=1e-4, linear_end=2e-2):
    return np.linspace(linear_start, linear_end, n_timestep, dtype=np.float64)


# --------------------------------------------------------------------------
# Spatial tiling.  Big lane-dense tiles amortize the ~600-cycle per-grid-step
# overhead.  thw = 16384 keeps the double-buffered input DMAs (3 streams x 2
# buffers x 8 padded sublanes x thw x 4B ~= 3 MiB) plus the (Hd, thw) f32
# intermediate well inside even v5e's 16 MiB scoped-VMEM default; the limit
# is still raised explicitly below for headroom.
# --------------------------------------------------------------------------
_MAX_HW_TILE = 16384


def _spatial_tiling(hw):
    """Returns (hw_padded, tile_width, num_tiles); hw_padded % tile_width == 0."""
    hw_pad = ((hw + 127) // 128) * 128          # lane-align
    if hw_pad <= _MAX_HW_TILE:
        return hw_pad, hw_pad, 1
    thw = _MAX_HW_TILE
    n = -(-hw_pad // thw)
    return n * thw, thw, n


# --------------------------------------------------------------------------
# Fused p_losses kernel:
#   q_sample -> 1x1-conv denoiser (noise-level conditioned) -> partial L1 sum
# Grid: (B, spatial_outer, spatial_inner).  Per grid point the block views:
#   x/cond/noise : (1, C, thw) f32   (lane-dense, H*W in lanes)
#   w1c_t, w1x_t : (Hd, C) bf16      (first-layer weight, split by concat half)
#   b1           : (1, Hd, 1) f32    (per-batch bias incl. noise-level embedding)
#   w2_t         : (C, Hd) bf16, b2: (C, 1) f32
#   out          : (1, 1, 8, 128)    per-(batch, outer-chunk) resident L1 tile
# --------------------------------------------------------------------------
def _fused_p_losses_kernel(s_ref, r_ref, x_ref, cond_ref, noise_ref,
                           w1c_ref, w1x_ref, b1_ref, w2t_ref, b2_ref, o_ref,
                           *, hw, thw, ti, need_mask):
    b = pl.program_id(0)

    @pl.when(pl.program_id(2) == 0)
    def _():
        o_ref[...] = jnp.zeros_like(o_ref)

    s = s_ref[b]                     # sqrt(gamma)        (SMEM scalar)
    r = r_ref[b]                     # sqrt(1 - gamma)    (SMEM scalar)
    x = x_ref[0]                     # (C, thw) f32
    cond = cond_ref[0]               # (C, thw) f32
    noise = noise_ref[0]             # (C, thw) f32

    # ---- q_sample (never leaves VMEM) ----
    x_noisy = s * x + r * noise                                   # (C, thw) f32

    # ---- denoiser: concat([cond, x_noisy]) folded into split weights ----
    # bf16 MXU operands, f32 accumulation (halves push/vreg traffic of the
    # (Hd, thw) intermediate).
    h = (jnp.dot(w1c_ref[...], cond.astype(jnp.bfloat16),
                 preferred_element_type=jnp.float32)
         + jnp.dot(w1x_ref[...], x_noisy.astype(jnp.bfloat16),
                   preferred_element_type=jnp.float32)
         + b1_ref[0])                                             # (Hd, thw)
    h = jnp.maximum(h, 0.0)
    y = (jnp.dot(w2t_ref[...], h.astype(jnp.bfloat16),
                 preferred_element_type=jnp.float32)
         + b2_ref[...])                                           # (C, thw)

    # ---- L1 loss, reduction='sum': per-tile partial, accumulated ----
    err = jnp.abs(noise - y)
    if need_mask:  # static trace-time branch: zero the spatial padding tail
        base = (pl.program_id(1) * ti + pl.program_id(2)) * thw
        lane = jax.lax.broadcasted_iota(jnp.int32, err.shape, 1)
        err = jnp.where(base + lane < hw, err, 0.0)

    # TODO(synk): lane-wise partial accumulation (reduce over C only, do the
    # cross-lane fold once in the wrapper) would save a per-step XLU reduce;
    # kept as a scalar accumulate for lowering robustness (~single-digit %).
    o_ref[...] += jnp.sum(err)


@jax.jit
def _p_losses_device(x_in, noisy_img, noise, s,
                     w1c_t, w1x_t, b1, wt, bt, w2_t, b2_col):
    B, C, H, W = x_in.shape
    hw = H * W
    Hd = w1c_t.shape[0]
    hw_pad, thw, t_total = _spatial_tiling(hw)

    r = jnp.sqrt(1.0 - s * s)
    # fold the noise-level embedding into the first-layer bias (tiny (B,Hd) op)
    bias1 = (b1 + s[:, None] * wt + bt).reshape(B, Hd, 1)

    def flat(a):
        a = a.reshape(B, C, hw)
        if hw_pad != hw:
            a = jnp.pad(a, ((0, 0), (0, 0), (0, hw_pad - hw)))
        return a

    x3, cond3, noise3 = flat(x_in), flat(noisy_img), flat(noise)

    # Split the spatial-tile axis into (outer parallel, inner arbitrary) so the
    # grid keeps >=2 blocks on a parallel axis even when B == 1 (v7x: 2 TCs).
    if B >= 2 or t_total == 1 or (t_total % 2):
        to, ti = 1, t_total
    else:
        to, ti = 2, t_total // 2

    cost = pl.CostEstimate(
        flops=2 * B * hw_pad * Hd * 3 * C,
        transcendentals=0,
        bytes_accessed=3 * B * C * hw_pad * 4 + B * to * 8 * 128 * 4)

    kern = functools.partial(_fused_p_losses_kernel,
                             hw=hw, thw=thw, ti=ti, need_mask=(hw_pad != hw))

    acc = pl.pallas_call(
        kern,
        out_shape=jax.ShapeDtypeStruct((B, to, 8, 128), jnp.float32),
        grid=(B, to, ti),
        in_specs=[
            pl.BlockSpec(memory_space=pltpu.MemorySpace.SMEM),          # s (B,)
            pl.BlockSpec(memory_space=pltpu.MemorySpace.SMEM),          # r (B,)
            pl.BlockSpec((1, C, thw), lambda b, o, i: (b, 0, o * ti + i)),  # x_in
            pl.BlockSpec((1, C, thw), lambda b, o, i: (b, 0, o * ti + i)),  # noisy_img
            pl.BlockSpec((1, C, thw), lambda b, o, i: (b, 0, o * ti + i)),  # noise
            pl.BlockSpec((Hd, C), lambda b, o, i: (0, 0)),              # w1 cond half^T
            pl.BlockSpec((Hd, C), lambda b, o, i: (0, 0)),              # w1 x_noisy^T
            pl.BlockSpec((1, Hd, 1), lambda b, o, i: (b, 0, 0)),        # per-batch bias1
            pl.BlockSpec((C, Hd), lambda b, o, i: (0, 0)),              # w2^T
            pl.BlockSpec((C, 1), lambda b, o, i: (0, 0)),               # b2 column
        ],
        out_specs=pl.BlockSpec((1, 1, 8, 128), lambda b, o, i: (b, o, 0, 0)),
        compiler_params=pltpu.CompilerParams(
            dimension_semantics=("parallel", "parallel", "arbitrary"),
            vmem_limit_bytes=32 * 1024 * 1024),
        cost_estimate=cost,
    )(s, r, x3, cond3, noise3, w1c_t, w1x_t, bias1, w2_t, b2_col)

    # every element of acc[b, o] holds that chunk's partial L1 sum
    return jnp.sum(acc[:, :, 0, 0])


# --------------------------------------------------------------------------
# GaussianDiffusion (forward == p_losses) using the fused kernel
# --------------------------------------------------------------------------
class GaussianDiffusionPallas:
    def __init__(self, image_size, channels=3, hidden=32, loss_type="l1",
                 conditional=True, n_timestep=100,
                 linear_start=1e-4, linear_end=2e-2):
        assert loss_type == "l1"   # nn.L1Loss(reduction='sum'); TODO(synk): l2 branch not implemented
        assert conditional         # TODO(synk): unconditional branch not implemented
        self.channels = channels
        self.image_size = image_size
        self.cond = conditional
        self.timesteps_n = n_timestep
        # advances across calls, like the torch module's use of global np.random
        self._np_rng = np.random.RandomState(0)

        betas = make_linear_beta_schedule(n_timestep, linear_start, linear_end)
        alphas = 1.0 - betas
        gamma = np.cumprod(alphas, axis=0)
        # sqrt_gamma_tmin1[t] = sqrt(gamma_{t-1}) with gamma_{-1} := 1
        self.sqrt_gamma_tmin1 = np.sqrt(np.append(1.0, gamma)).astype(np.float64)

        # Deterministic synthetic denoiser (2C -> hidden -> C 1x1 conv with
        # noise-level conditioning).  TODO(synk): the real diffusion_net is an
        # external UNet passed into __init__; replaced here by this synthetic
        # net, whose matmuls use bf16 operands / f32 accumulation.
        C2 = 2 * channels
        k1, k2, k3, k4 = jax.random.split(jax.random.PRNGKey(42), 4)
        self.params = {
            "w1": (jax.random.normal(k1, (C2, hidden), jnp.float32)
                   * (1.0 / np.sqrt(C2))),
            "b1": jnp.zeros((1, hidden), jnp.float32),
            "wt": jax.random.normal(k2, (1, hidden), jnp.float32) * 0.1,
            "bt": jax.random.normal(k3, (1, hidden), jnp.float32) * 0.01,
            "w2": (jax.random.normal(k4, (hidden, channels), jnp.float32)
                   * (1.0 / np.sqrt(hidden))),
            "b2": jnp.zeros((1, channels), jnp.float32),
        }
        # kernel-layout weights (lane-dense matmul orientation, bf16 operands)
        self.w1c_t = jnp.transpose(self.params["w1"][:channels]).astype(jnp.bfloat16)
        self.w1x_t = jnp.transpose(self.params["w1"][channels:]).astype(jnp.bfloat16)
        self.w2_t = jnp.transpose(self.params["w2"]).astype(jnp.bfloat16)
        self.b2_col = jnp.transpose(self.params["b2"])                  # (C, 1) f32

    def sample_continuous_sqrt_gamma(self, batch):
        """Timestep + per-batch continuous sqrt(gamma) draw (matches torch p_losses)."""
        t = int(self._np_rng.randint(1, self.timesteps_n + 1))
        return self._np_rng.uniform(self.sqrt_gamma_tmin1[t - 1],
                                    self.sqrt_gamma_tmin1[t],
                                    size=batch).astype(np.float32)

    def forward(self, x_in, noisy_img, noise=None, *, noise_key=None,
                continuous_sqrt_gamma=None):
        """p_losses: q_sample -> diffusion_net(concat) -> L1(sum), fully fused."""
        B = x_in.shape[0]
        if continuous_sqrt_gamma is None:
            continuous_sqrt_gamma = self.sample_continuous_sqrt_gamma(B)
        s = jnp.asarray(continuous_sqrt_gamma, jnp.float32)              # (B,)
        if noise is None:
            # TODO(synk): generating noise in-kernel via pltpu.prng_* would cut
            # one full HBM read stream + the producer write, but changes the
            # noise stream vs this JAX reference.
            noise = jax.random.normal(noise_key, x_in.shape, jnp.float32)
        p = self.params
        return _p_losses_device(x_in, noisy_img, noise, s,
                                self.w1c_t, self.w1x_t, p["b1"], p["wt"],
                                p["bt"], self.w2_t, self.b2_col)

    # pure-JAX reference for validation (same math, channels-last)
    def forward_ref(self, x_in, noisy_img, noise=None, *, noise_key=None,
                    continuous_sqrt_gamma=None):
        B, C, H, W = x_in.shape
        if continuous_sqrt_gamma is None:
            continuous_sqrt_gamma = self.sample_continuous_sqrt_gamma(B)
        s = jnp.asarray(continuous_sqrt_gamma, jnp.float32)
        if noise is None:
            noise = jax.random.normal(noise_key, x_in.shape, jnp.float32)
        p = self.params
        s4 = s.reshape(B, 1, 1, 1)
        x_noisy = s4 * x_in + jnp.sqrt(1.0 - s4 * s4) * noise
        x_cat = jnp.concatenate([noisy_img, x_noisy], axis=1)
        x_cl = jnp.transpose(x_cat, (0, 2, 3, 1)).reshape(B, H * W, 2 * C)
        t_emb = s.reshape(B, 1, 1) * p["wt"][None] + p["bt"][None]
        h = jnp.einsum("bnc,ch->bnh", x_cl.astype(jnp.bfloat16),
                       p["w1"].astype(jnp.bfloat16),
                       preferred_element_type=jnp.float32) + p["b1"][None] + t_emb
        h = jnp.maximum(h, 0.0)
        out = jnp.einsum("bnh,hc->bnc", h.astype(jnp.bfloat16),
                         p["w2"].astype(jnp.bfloat16),
                         preferred_element_type=jnp.float32) + p["b2"][None]
        x_recon = jnp.transpose(out.reshape(B, H, W, C), (0, 3, 1, 2))
        return jnp.sum(jnp.abs(noise - x_recon))


# --------------------------------------------------------------------------
if __name__ == "__main__":
    B, C, H, W = 2, 3, 16, 16

    key = jax.random.PRNGKey(0)
    k_x, k_cond, k_noise = jax.random.split(key, 3)
    x_in = jax.random.normal(k_x, (B, C, H, W), jnp.float32)          # clean image
    noisy_img = jax.random.normal(k_cond, (B, C, H, W), jnp.float32)  # conditioning

    model = GaussianDiffusionPallas(image_size=H, channels=C, hidden=32,
                                    loss_type="l1", conditional=True,
                                    n_timestep=100)

    # draw the timestep / continuous sqrt-gamma once (RNG advances across
    # calls like the torch module) and reuse it for both kernel and reference
    csg = model.sample_continuous_sqrt_gamma(B)
    noise = jax.random.normal(k_noise, (B, C, H, W), jnp.float32)

    loss = jax.block_until_ready(
        model.forward(x_in, noisy_img, noise=noise, continuous_sqrt_gamma=csg))
    loss_ref = jax.block_until_ready(
        model.forward_ref(x_in, noisy_img, noise=noise, continuous_sqrt_gamma=csg))
    np.testing.assert_allclose(np.asarray(loss), np.asarray(loss_ref),
                               rtol=2e-3, atol=2e-3)

    print("KERNEL_OK")
</pallas_src>

<mosaic_0001>
module attributes {stable_mosaic.version = 11 : i64} {
  func.func @_fused_p_losses_kernel(%arg0: i32, %arg1: i32, %arg2: i32, %arg3: memref<2xf32, #tpu.memory_space<smem>>, %arg4: memref<2xf32, #tpu.memory_space<smem>>, %arg5: memref<1x3x256xf32, #tpu.memory_space<vmem>>, %arg6: memref<1x3x256xf32, #tpu.memory_space<vmem>>, %arg7: memref<1x3x256xf32, #tpu.memory_space<vmem>>, %arg8: memref<32x3xbf16, #tpu.memory_space<vmem>>, %arg9: memref<32x3xbf16, #tpu.memory_space<vmem>>, %arg10: memref<1x32x1xf32, #tpu.memory_space<vmem>>, %arg11: memref<3x32xbf16, #tpu.memory_space<vmem>>, %arg12: memref<3x1xf32, #tpu.memory_space<vmem>>, %arg13: memref<1x1x8x128xf32, #tpu.memory_space<vmem>>) attributes {dimension_semantics = [#tpu.dimension_semantics<parallel>, #tpu.dimension_semantics<parallel>, #tpu.dimension_semantics<arbitrary>], iteration_bounds = array<i64: 2, 1, 1>, scalar_prefetch = 0 : i64, scratch_operands = 0 : i64, tpu.core_type = #tpu.core_type<tc>, window_params = [{transform_indices = @transform_0, window_bounds = array<i64: 2>}, {transform_indices = @transform_1, window_bounds = array<i64: 2>}, {transform_indices = @transform_2, window_bounds = array<i64: 1, 3, 256>}, {transform_indices = @transform_3, window_bounds = array<i64: 1, 3, 256>}, {transform_indices = @transform_4, window_bounds = array<i64: 1, 3, 256>}, {pipeline_mode = #tpu.pipeline_mode<synchronous>, transform_indices = @transform_5, window_bounds = array<i64: 32, 3>}, {pipeline_mode = #tpu.pipeline_mode<synchronous>, transform_indices = @transform_6, window_bounds = array<i64: 32, 3>}, {transform_indices = @transform_7, window_bounds = array<i64: 1, 32, 1>}, {pipeline_mode = #tpu.pipeline_mode<synchronous>, transform_indices = @transform_8, window_bounds = array<i64: 3, 32>}, {pipeline_mode = #tpu.pipeline_mode<synchronous>, transform_indices = @transform_9, window_bounds = array<i64: 3, 1>}, {transform_indices = @transform_10, window_bounds = array<i64: 1, 1, 8, 128>}]} {
    %c0_i32 = arith.constant 0 : i32
    %0 = arith.cmpi eq, %arg2, %c0_i32 : i32
    %1 = arith.extui %0 : i1 to i32
    %c0_i32_0 = arith.constant 0 : i32
    %2 = arith.cmpi ne, %1, %c0_i32_0 : i32
    scf.if %2 {
      %cst_32 = arith.constant 0.000000e+00 : f32
      %47 = vector.broadcast %cst_32 : f32 to vector<1x1x8x128xf32>
      %c0_33 = arith.constant 0 : index
      %c0_34 = arith.constant 0 : index
      %c0_35 = arith.constant 0 : index
      %c0_36 = arith.constant 0 : index
      %48 = vector.load %arg13[%c0_33, %c0_34, %c0_35, %c0_36] : memref<1x1x8x128xf32, #tpu.memory_space<vmem>>, vector<1x1x8x128xf32>
      tpu.vector_store %arg13[%c0_33, %c0_34, %c0_35, %c0_36], %47 {strides = array<i32>} : memref<1x1x8x128xf32, #tpu.memory_space<vmem>>, vector<1x1x8x128xf32>,
    } else {
    }
    %3 = arith.index_cast %arg0 : i32 to index
    %4 = memref.load %arg3[%3] : memref<2xf32, #tpu.memory_space<smem>>
    %5 = arith.index_cast %arg0 : i32 to index
    %6 = memref.load %arg4[%5] : memref<2xf32, #tpu.memory_space<smem>>
    %c0 = arith.constant 0 : index
    %c0_1 = arith.constant 0 : index
    %c0_2 = arith.constant 0 : index
    %7 = vector.load %arg5[%c0, %c0_1, %c0_2] : memref<1x3x256xf32, #tpu.memory_space<vmem>>, vector<1x3x256xf32>
    %8 = vector.shape_cast %7 : vector<1x3x256xf32> to vector<3x256xf32>
    %c0_3 = arith.constant 0 : index
    %c0_4 = arith.constant 0 : index
    %c0_5 = arith.constant 0 : index
    %9 = vector.load %arg6[%c0_3, %c0_4, %c0_5] : memref<1x3x256xf32, #tpu.memory_space<vmem>>, vector<1x3x256xf32>
    %10 = vector.shape_cast %9 : vector<1x3x256xf32> to vector<3x256xf32>
    %c0_6 = arith.constant 0 : index
    %c0_7 = arith.constant 0 : index
    %c0_8 = arith.constant 0 : index
    %11 = vector.load %arg7[%c0_6, %c0_7, %c0_8] : memref<1x3x256xf32, #tpu.memory_space<vmem>>, vector<1x3x256xf32>
    %12 = vector.shape_cast %11 : vector<1x3x256xf32> to vector<3x256xf32>
    %13 = vector.broadcast %4 : f32 to vector<3x256xf32>
    %14 = arith.mulf %13, %8 : vector<3x256xf32>
    %15 = vector.broadcast %6 : f32 to vector<3x256xf32>
    %16 = arith.mulf %15, %12 : vector<3x256xf32>
    %17 = arith.addf %14, %16 : vector<3x256xf32>
    %c0_9 = arith.constant 0 : index
    %c0_10 = arith.constant 0 : index
    %18 = vector.load %arg8[%c0_9, %c0_10] : memref<32x3xbf16, #tpu.memory_space<vmem>>, vector<32x3xbf16>
    %19 = arith.truncf %10 : vector<3x256xf32> to vector<3x256xbf16>
    %cst = arith.constant dense<0.000000e+00> : vector<32x256xf32>
    %20 = tpu.matmul %18, %19, %cst {dimension_numbers = #tpu.dot_dimension_numbers<[1], [0], [0], [1], [0, 0, 1, 1], [], []>} : vector<32x3xbf16>, vector<3x256xbf16>, vector<32x256xf32> -> vector<32x256xf32>
    %c0_11 = arith.constant 0 : index
    %c0_12 = arith.constant 0 : index
    %21 = vector.load %arg9[%c0_11, %c0_12] : memref<32x3xbf16, #tpu.memory_space<vmem>>, vector<32x3xbf16>
    %22 = arith.truncf %17 : vector<3x256xf32> to vector<3x256xbf16>
    %cst_13 = arith.constant dense<0.000000e+00> : vector<32x256xf32>
    %23 = tpu.matmul %21, %22, %cst_13 {dimension_numbers = #tpu.dot_dimension_numbers<[1], [0], [0], [1], [0, 0, 1, 1], [], []>} : vector<32x3xbf16>, vector<3x256xbf16>, vector<32x256xf32> -> vector<32x256xf32>
    %24 = arith.addf %20, %23 : vector<32x256xf32>
    %c0_14 = arith.constant 0 : index
    %c0_15 = arith.constant 0 : index
    %c0_16 = arith.constant 0 : index
    %25 = vector.load %arg10[%c0_14, %c0_15, %c0_16] : memref<1x32x1xf32, #tpu.memory_space<vmem>>, vector<1x32x1xf32>
    %26 = vector.shape_cast %25 : vector<1x32x1xf32> to vector<32x1xf32>
    %27 = vector.broadcast %26 : vector<32x1xf32> to vector<32x256xf32>
    %28 = arith.addf %24, %27 : vector<32x256xf32>
    %cst_17 = arith.constant 0.000000e+00 : f32
    %29 = vector.broadcast %cst_17 : f32 to vector<32x256xf32>
    %30 = arith.maximumf %28, %29 : vector<32x256xf32>
    %c0_18 = arith.constant 0 : index
    %c0_19 = arith.constant 0 : index
    %31 = vector.load %arg11[%c0_18, %c0_19] : memref<3x32xbf16, #tpu.memory_space<vmem>>, vector<3x32xbf16>
    %32 = arith.truncf %30 : vector<32x256xf32> to vector<32x256xbf16>
    %cst_20 = arith.constant dense<0.000000e+00> : vector<3x256xf32>
    %33 = tpu.matmul %31, %32, %cst_20 {dimension_numbers = #tpu.dot_dimension_numbers<[1], [0], [0], [1], [0, 0, 1, 1], [], []>} : vector<3x32xbf16>, vector<32x256xbf16>, vector<3x256xf32> -> vector<3x256xf32>
    %c0_21 = arith.constant 0 : index
    %c0_22 = arith.constant 0 : index
    %34 = vector.load %arg12[%c0_21, %c0_22] : memref<3x1xf32, #tpu.memory_space<vmem>>, vector<3x1xf32>
    %35 = vector.broadcast %34 : vector<3x1xf32> to vector<3x256xf32>
    %36 = arith.addf %33, %35 : vector<3x256xf32>
    %37 = arith.subf %12, %36 : vector<3x256xf32>
    %38 = math.absf %37 : vector<3x256xf32>
    %c0_23 = arith.constant 0 : index
    %c0_24 = arith.constant 0 : index
    %c0_25 = arith.constant 0 : index
    %c0_26 = arith.constant 0 : index
    %39 = vector.load %arg13[%c0_23, %c0_24, %c0_25, %c0_26] : memref<1x1x8x128xf32, #tpu.memory_space<vmem>>, vector<1x1x8x128xf32>
    %40 = vector.shape_cast %38 : vector<3x256xf32> to vector<1x3x256xf32>
    %cst_27 = arith.constant dense<0.000000e+00> : vector<1xf32>
    %41 = vector.multi_reduction <add>, %40, %cst_27 [1, 2] : vector<1x3x256xf32> to vector<1xf32>
    %42 = vector.shape_cast %41 : vector<1xf32> to vector<1x1x1xf32>
    %43 = vector.extract %42[0, 0, 0] : f32 from vector<1x1x1xf32>
    %44 = vector.broadcast %43 : f32 to vector<1x1x8x128xf32>
    %45 = arith.addf %39, %44 : vector<1x1x8x128xf32>
    %c0_28 = arith.constant 0 : index
    %c0_29 = arith.constant 0 : index
    %c0_30 = arith.constant 0 : index
    %c0_31 = arith.constant 0 : index
    %46 = vector.load %arg13[%c0_28, %c0_29, %c0_30, %c0_31] : memref<1x1x8x128xf32, #tpu.memory_space<vmem>>, vector<1x1x8x128xf32>
    tpu.vector_store %arg13[%c0_28, %c0_29, %c0_30, %c0_31], %45 {strides = array<i32>} : memref<1x1x8x128xf32, #tpu.memory_space<vmem>>, vector<1x1x8x128xf32>,
    return
  }
  func.func @transform_0(%arg0: i32, %arg1: i32, %arg2: i32) -> i32 {
    %c0_i32 = arith.constant 0 : i32
    %c0_i32_0 = arith.constant 0 : i32
    return %c0_i32 : i32
  }
  func.func @transform_1(%arg0: i32, %arg1: i32, %arg2: i32) -> i32 {
    %c0_i32 = arith.constant 0 : i32
    %c0_i32_0 = arith.constant 0 : i32
    return %c0_i32 : i32
  }
  func.func @transform_2(%arg0: i32, %arg1: i32, %arg2: i32) -> (i32, i32, i32) {
    %c1_i32 = arith.constant 1 : i32
    %0 = arith.muli %arg1, %c1_i32 : i32
    %1 = arith.addi %0, %arg2 : i32
    %c0_i32 = arith.constant 0 : i32
    %c0_i32_0 = arith.constant 0 : i32
    return %arg0, %c0_i32, %1 : i32, i32, i32
  }
  func.func @transform_3(%arg0: i32, %arg1: i32, %arg2: i32) -> (i32, i32, i32) {
    %c1_i32 = arith.constant 1 : i32
    %0 = arith.muli %arg1, %c1_i32 : i32
    %1 = arith.addi %0, %arg2 : i32
    %c0_i32 = arith.constant 0 : i32
    %c0_i32_0 = arith.constant 0 : i32
    return %arg0, %c0_i32, %1 : i32, i32, i32
  }
  func.func @transform_4(%arg0: i32, %arg1: i32, %arg2: i32) -> (i32, i32, i32) {
    %c1_i32 = arith.constant 1 : i32
    %0 = arith.muli %arg1, %c1_i32 : i32
    %1 = arith.addi %0, %arg2 : i32
    %c0_i32 = arith.constant 0 : i32
    %c0_i32_0 = arith.constant 0 : i32
    return %arg0, %c0_i32, %1 : i32, i32, i32
  }
  func.func @transform_5(%arg0: i32, %arg1: i32, %arg2: i32) -> (i32, i32) {
    %c0_i32 = arith.constant 0 : i32
    %c0_i32_0 = arith.constant 0 : i32
    %c0_i32_1 = arith.constant 0 : i32
    return %c0_i32, %c0_i32_0 : i32, i32
  }
  func.func @transform_6(%arg0: i32, %arg1: i32, %arg2: i32) -> (i32, i32) {
    %c0_i32 = arith.constant 0 : i32
    %c0_i32_0 = arith.constant 0 : i32
    %c0_i32_1 = arith.constant 0 : i32
    return %c0_i32, %c0_i32_0 : i32, i32
  }
  func.func @transform_7(%arg0: i32, %arg1: i32, %arg2: i32) -> (i32, i32, i32) {
    %c0_i32 = arith.constant 0 : i32
    %c0_i32_0 = arith.constant 0 : i32
    %c0_i32_1 = arith.constant 0 : i32
    return %arg0, %c0_i32, %c0_i32_0 : i32, i32, i32
  }
  func.func @transform_8(%arg0: i32, %arg1: i32, %arg2: i32) -> (i32, i32) {
    %c0_i32 = arith.constant 0 : i32
    %c0_i32_0 = arith.constant 0 : i32
    %c0_i32_1 = arith.constant 0 : i32
    return %c0_i32, %c0_i32_0 : i32, i32
  }
  func.func @transform_9(%arg0: i32, %arg1: i32, %arg2: i32) -> (i32, i32) {
    %c0_i32 = arith.constant 0 : i32
    %c0_i32_0 = arith.constant 0 : i32
    %c0_i32_1 = arith.constant 0 : i32
    return %c0_i32, %c0_i32_0 : i32, i32
  }
  func.func @transform_10(%arg0: i32, %arg1: i32, %arg2: i32) -> (i32, i32, i32, i32) {
    %c0_i32 = arith.constant 0 : i32
    %c0_i32_0 = arith.constant 0 : i32
    %c0_i32_1 = arith.constant 0 : i32
    return %arg0, %arg1, %c0_i32, %c0_i32_0 : i32, i32, i32, i32
  }
}

</mosaic_0001>

<llo_original>
// kernel: _p_losses_device.1
$region0: #{_p_losses_device.1}
  #allocation0 [shape = 'u32[]', space=smem, size = 0x4, offset = 0x4, fixed_abs, tag = 'smem constant byte address 0x4 - core index']
  #allocation1 [shape = 'u32[144,128]{1,0:T(1,128)}', space=vmem, size = 0x12000, scoped, tag = 'internal scratch']
  %s0 = inlined_call_operand.vmem [shape: f32[2], index: 0, kind: input, shape index: {}]
  %s1 = inlined_call_operand.vmem [shape: f32[2], index: 1, kind: input, shape index: {}]
  %s2 = inlined_call_operand.vmem [shape: f32[2,3,256], index: 2, kind: input, shape index: {}]
  %s3 = inlined_call_operand.vmem [shape: f32[2,3,256], index: 3, kind: input, shape index: {}]
  %s4 = inlined_call_operand.vmem [shape: f32[2,3,256], index: 4, kind: input, shape index: {}]
  %s5 = inlined_call_operand.vmem [shape: bf16[32,3], index: 5, kind: input, shape index: {}]
  %s6 = inlined_call_operand.vmem [shape: bf16[32,3], index: 6, kind: input, shape index: {}]
  %s7 = inlined_call_operand.vmem [shape: f32[2,32,1], index: 7, kind: input, shape index: {}]
  %s8 = inlined_call_operand.vmem [shape: bf16[3,32], index: 8, kind: input, shape index: {}]
  %s9 = inlined_call_operand.vmem [shape: f32[3,1], index: 9, kind: input, shape index: {}]
  %s10 = inlined_call_operand.vmem [shape: f32[2,1,8,128], index: 10, kind: output, shape index: {}]
  %s11 = sld [smem:[#allocation0]]
  $region85: #{_p_losses_device.1} parent=0
    _
  %s13 = ssub.s32 1, %s11
  %s14 = scalar_select 0, %s13, %s11
  $region1: #{_p_losses_device.1} parent=0
    #allocation2 [shape = 'u8[512]{0}', space=smem, size = 0x200, scoped, tag = 'input window, operand 0, single buffered']
    #allocation3 [shape = 's32[2]{0}', space=sflag, size = 0x8, scoped, tag = 'scoped memory for _p_losses_device.1']
    #allocation4 [shape = 'u8[512]{0}', space=smem, size = 0x200, scoped, tag = 'input window, operand 1, single buffered']
    #allocation5 [shape = 's32[1]{0}', space=sflag, size = 0x4, scoped, tag = 'scoped memory for _p_losses_device.1']
    %15 = vsyncpa [#allocation3], 0
    %16 = vsyncpa [#allocation5], 0
    loop: start=0, step=1, limit=4
    $region2: #{_p_losses_device.1} parent=1 // loop_pre_header
      _
    $region3: #{_p_losses_device.1} parent=1 // loop_header
      %s18 = sphi 0, %s22
      %p19 = scmp.ge.s32.totalorder %s18, 4
      %s25 = sphi 0, %s44
      %s26 = sphi 0, %s40
      %s27 = sphi 0, %s36
      %s28 = sphi 0, %s25
      %s29 = sphi 0, %s26
      %s30 = sphi 0, %s27
      %s31 = sphi 0, %s28
      %s32 = sphi 0, %s29
      %s33 = sphi 0, %s30
      %s45 = sphi 0, %s45
      %s47 = sphi 0, %s45
      %s48 = sphi 0, %s47
      %s62 = sphi 0, %s48
      %s66 = sphi 0, %s66
      %s68 = sphi 0, %s66
      %s69 = sphi 0, %s68
      %s83 = sphi 0, %s69
      %s93 = sphi 0, %s95
      %s96 = sphi 0, %s93
      %s97 = sphi 0, %s96
      %s113 = sphi 0, %s97
      %s123 = sphi 0, %s125
      %s126 = sphi 0, %s123
      %s127 = sphi 0, %s126
      %s143 = sphi 0, %s127
      %s153 = sphi 0, %s155
      %s156 = sphi 0, %s153
      %s157 = sphi 0, %s156
      %s173 = sphi 0, %s157
      %s177 = sphi 0, %s177
      %s179 = sphi 0, %s177
      %s180 = sphi 0, %s179
      %s194 = sphi 0, %s180
      %s198 = sphi 0, %s198
      %s200 = sphi 0, %s198
      %s201 = sphi 0, %s200
      %s215 = sphi 0, %s201
      %s221 = sphi 0, %s223
      %s224 = sphi 0, %s221
      %s225 = sphi 0, %s224
      %s241 = sphi 0, %s225
      %s245 = sphi 0, %s245
      %s247 = sphi 0, %s245
      %s248 = sphi 0, %s247
      %s262 = sphi 0, %s248
      %s266 = sphi 0, %s266
      %s268 = sphi 0, %s266
      %s269 = sphi 0, %s268
      %s283 = sphi 0, %s269
      %s291 = sphi 0, %s293
      %s294 = sphi 0, %s291
      %s295 = sphi 0, %s294
      %s311 = sphi 0, %s295
    $region4: #{_p_losses_device.1} parent=1 // loop_header_branch
      %21 = sbr.rel (%p19) target = $region8
    $region5: #{_p_losses_device.1} parent=1 // loop_body
      %s23 = ssub.s32 %s18, 1
      %s24 = ssub.s32 %s18, 2
      %s34 = sadd.s32 1, %s27
      %p35 = scmp.ge.s32.totalorder %s34, 1
      %s36 = scalar_select %p35, 0, %s34
      %s37 = sadd.s32 1, %s26
      %s38 = scalar_select %p35, %s37, %s26
      %p39 = scmp.ge.s32.totalorder %s38, 1
      %s40 = scalar_select %p39, 0, %s38
      %s41 = sadd.s32 1, %s25
      %s42 = scalar_select %p39, %s41, %s25
      %p43 = scmp.ge.s32.totalorder %s42, 2
      %s44 = scalar_select %p43, 0, %s42
      %s46 = sadd.s32 %s45, 1
      %p49 = scmp.eq.s32.totalorder %s18, 1
      %p50 = scmp.ne.s32.totalorder %s45, %s47
      %p51 = scmp.eq.s32.totalorder %s18, 0
      %p52 = por %p50, %p51
      %p53 = scmp.ne.s32.totalorder %s45, %s47
      %p54 = scmp.eq.s32.totalorder %s23, 1
      %p55 = por %p53, %p54
      %p56 = scmp.ne.s32.totalorder %s47, %s48
      %p57 = scmp.eq.s32.totalorder %s23, 0
      %p58 = por %p56, %p57
      %p59 = scmp.ne.s32.totalorder %s47, %s48
      %p60 = scmp.eq.s32.totalorder %s24, 1
      %p61 = por %p59, %p60
      %p63 = scmp.ne.s32.totalorder %s48, %s62
      %p64 = scmp.eq.s32.totalorder %s24, 0
      %p65 = por %p63, %p64
      %s67 = sadd.s32 %s66, 1
      %p70 = scmp.eq.s32.totalorder %s18, 1
      %p71 = scmp.ne.s32.totalorder %s66, %s68
      %p72 = scmp.eq.s32.totalorder %s18, 0
      %p73 = por %p71, %p72
      %p74 = scmp.ne.s32.totalorder %s66, %s68
      %p75 = scmp.eq.s32.totalorder %s23, 1
      %p76 = por %p74, %p75
      %p77 = scmp.ne.s32.totalorder %s68, %s69
      %p78 = scmp.eq.s32.totalorder %s23, 0
      %p79 = por %p77, %p78
      %p80 = scmp.ne.s32.totalorder %s68, %s69
      %p81 = scmp.eq.s32.totalorder %s24, 1
      %p82 = por %p80, %p81
      %p84 = scmp.ne.s32.totalorder %s69, %s83
      %p85 = scmp.eq.s32.totalorder %s24, 0
      %p86 = por %p84, %p85
      %s87 = sadd.s32 %s26, %s27
      %s88 = sadd.s32 %s40, %s36
      %s89 = ssub.s32 %s25, %s44
      %s90 = ssub.s32 %s87, %s88
      %s91 = sor.u32 %s89, %s90
      %p92 = scmp.eq.s32.totalorder %s91, 0
      %s94 = sadd.s32 %s93, 1
      %s95 = scalar_select %p92, %s93, %s94
      %p98 = pneg %p92
      %p99 = scmp.eq.s32.totalorder %s18, 1
      %p100 = por %p98, %p99
      %p101 = scmp.ne.s32.totalorder %s93, %s96
      %p102 = scmp.eq.s32.totalorder %s18, 0
      %p103 = por %p101, %p102
      %p104 = scmp.ne.s32.totalorder %s93, %s96
      %p105 = scmp.eq.s32.totalorder %s23, 1
      %p106 = por %p104, %p105
      %p107 = scmp.ne.s32.totalorder %s96, %s97
      %p108 = scmp.eq.s32.totalorder %s23, 0
      %p109 = por %p107, %p108
      %p110 = scmp.ne.s32.totalorder %s96, %s97
      %p111 = scmp.eq.s32.totalorder %s24, 1
      %p112 = por %p110, %p111
      %p114 = scmp.ne.s32.totalorder %s97, %s113
      %p115 = scmp.eq.s32.totalorder %s24, 0
      %p116 = por %p114, %p115
      %s117 = sadd.s32 %s26, %s27
      %s118 = sadd.s32 %s40, %s36
      %s119 = ssub.s32 %s25, %s44
      %s120 = ssub.s32 %s117, %s118
      %s121 = sor.u32 %s119, %s120
      %p122 = scmp.eq.s32.totalorder %s121, 0
      %s124 = sadd.s32 %s123, 1
      %s125 = scalar_select %p122, %s123, %s124
      %p128 = pneg %p122
      %p129 = scmp.eq.s32.totalorder %s18, 1
      %p130 = por %p128, %p129
      %p131 = scmp.ne.s32.totalorder %s123, %s126
      %p132 = scmp.eq.s32.totalorder %s18, 0
      %p133 = por %p131, %p132
      %p134 = scmp.ne.s32.totalorder %s123, %s126
      %p135 = scmp.eq.s32.totalorder %s23, 1
      %p136 = por %p134, %p135
      %p137 = scmp.ne.s32.totalorder %s126, %s127
      %p138 = scmp.eq.s32.totalorder %s23, 0
      %p139 = por %p137, %p138
      %p140 = scmp.ne.s32.totalorder %s126, %s127
      %p141 = scmp.eq.s32.totalorder %s24, 1
      %p142 = por %p140, %p141
      %p144 = scmp.ne.s32.totalorder %s127, %s143
      %p145 = scmp.eq.s32.totalorder %s24, 0
      %p146 = por %p144, %p145
      %s147 = sadd.s32 %s26, %s27
      %s148 = sadd.s32 %s40, %s36
      %s149 = ssub.s32 %s25, %s44
      %s150 = ssub.s32 %s147, %s148
      %s151 = sor.u32 %s149, %s150
      %p152 = scmp.eq.s32.totalorder %s151, 0
      %s154 = sadd.s32 %s153, 1
      %s155 = scalar_select %p152, %s153, %s154
      %p158 = pneg %p152
      %p159 = scmp.eq.s32.totalorder %s18, 1
      %p160 = por %p158, %p159
      %p161 = scmp.ne.s32.totalorder %s153, %s156
      %p162 = scmp.eq.s32.totalorder %s18, 0
      %p163 = por %p161, %p162
      %p164 = scmp.ne.s32.totalorder %s153, %s156
      %p165 = scmp.eq.s32.totalorder %s23, 1
      %p166 = por %p164, %p165
      %p167 = scmp.ne.s32.totalorder %s156, %s157
      %p168 = scmp.eq.s32.totalorder %s23, 0
      %p169 = por %p167, %p168
      %p170 = scmp.ne.s32.totalorder %s156, %s157
      %p171 = scmp.eq.s32.totalorder %s24, 1
      %p172 = por %p170, %p171
      %p174 = scmp.ne.s32.totalorder %s157, %s173
      %p175 = scmp.eq.s32.totalorder %s24, 0
      %p176 = por %p174, %p175
      %s178 = sadd.s32 %s177, 1
      %p181 = scmp.eq.s32.totalorder %s18, 1
      %p182 = scmp.ne.s32.totalorder %s177, %s179
      %p183 = scmp.eq.s32.totalorder %s18, 0
      %p184 = por %p182, %p183
      %p185 = scmp.ne.s32.totalorder %s177, %s179
      %p186 = scmp.eq.s32.totalorder %s23, 1
      %p187 = por %p185, %p186
      %p188 = scmp.ne.s32.totalorder %s179, %s180
      %p189 = scmp.eq.s32.totalorder %s23, 0
      %p190 = por %p188, %p189
      %p191 = scmp.ne.s32.totalorder %s179, %s180
      %p192 = scmp.eq.s32.totalorder %s24, 1
      %p193 = por %p191, %p192
      %p195 = scmp.ne.s32.totalorder %s180, %s194
      %p196 = scmp.eq.s32.totalorder %s24, 0
      %p197 = por %p195, %p196
      %s199 = sadd.s32 %s198, 1
      %p202 = scmp.eq.s32.totalorder %s18, 1
      %p203 = scmp.ne.s32.totalorder %s198, %s200
      %p204 = scmp.eq.s32.totalorder %s18, 0
      %p205 = por %p203, %p204
      %p206 = scmp.ne.s32.totalorder %s198, %s200
      %p207 = scmp.eq.s32.totalorder %s23, 1
      %p208 = por %p206, %p207
      %p209 = scmp.ne.s32.totalorder %s200, %s201
      %p210 = scmp.eq.s32.totalorder %s23, 0
      %p211 = por %p209, %p210
      %p212 = scmp.ne.s32.totalorder %s200, %s201
      %p213 = scmp.eq.s32.totalorder %s24, 1
      %p214 = por %p212, %p213
      %p216 = scmp.ne.s32.totalorder %s201, %s215
      %p217 = scmp.eq.s32.totalorder %s24, 0
      %p218 = por %p216, %p217
      %s219 = ssub.s32 %s25, %s44
      %p220 = scmp.eq.s32.totalorder %s219, 0
      %s222 = sadd.s32 %s221, 1
      %s223 = scalar_select %p220, %s221, %s222
      %p226 = pneg %p220
      %p227 = scmp.eq.s32.totalorder %s18, 1
      %p228 = por %p226, %p227
      %p229 = scmp.ne.s32.totalorder %s221, %s224
      %p230 = scmp.eq.s32.totalorder %s18, 0
      %p231 = por %p229, %p230
      %p232 = scmp.ne.s32.totalorder %s221, %s224
      %p233 = scmp.eq.s32.totalorder %s23, 1
      %p234 = por %p232, %p233
      %p235 = scmp.ne.s32.totalorder %s224, %s225
      %p236 = scmp.eq.s32.totalorder %s23, 0
      %p237 = por %p235, %p236
      %p238 = scmp.ne.s32.totalorder %s224, %s225
      %p239 = scmp.eq.s32.totalorder %s24, 1
      %p240 = por %p238, %p239
      %p242 = scmp.ne.s32.totalorder %s225, %s241
      %p243 = scmp.eq.s32.totalorder %s24, 0
      %p244 = por %p242, %p243
      %s246 = sadd.s32 %s245, 1
      %p249 = scmp.eq.s32.totalorder %s18, 1
      %p250 = scmp.ne.s32.totalorder %s245, %s247
      %p251 = scmp.eq.s32.totalorder %s18, 0
      %p252 = por %p250, %p251
      %p253 = scmp.ne.s32.totalorder %s245, %s247
      %p254 = scmp.eq.s32.totalorder %s23, 1
      %p255 = por %p253, %p254
      %p256 = scmp.ne.s32.totalorder %s247, %s248
      %p257 = scmp.eq.s32.totalorder %s23, 0
      %p258 = por %p256, %p257
      %p259 = scmp.ne.s32.totalorder %s247, %s248
      %p260 = scmp.eq.s32.totalorder %s24, 1
      %p261 = por %p259, %p260
      %p263 = scmp.ne.s32.totalorder %s248, %s262
      %p264 = scmp.eq.s32.totalorder %s24, 0
      %p265 = por %p263, %p264
      %s267 = sadd.s32 %s266, 1
      %p270 = scmp.eq.s32.totalorder %s18, 1
      %p271 = scmp.ne.s32.totalorder %s266, %s268
      %p272 = scmp.eq.s32.totalorder %s18, 0
      %p273 = por %p271, %p272
      %p274 = scmp.ne.s32.totalorder %s266, %s268
      %p275 = scmp.eq.s32.totalorder %s23, 1
      %p276 = por %p274, %p275
      %p277 = scmp.ne.s32.totalorder %s268, %s269
      %p278 = scmp.eq.s32.totalorder %s23, 0
      %p279 = por %p277, %p278
      %p280 = scmp.ne.s32.totalorder %s268, %s269
      %p281 = scmp.eq.s32.totalorder %s24, 1
      %p282 = por %p280, %p281
      %p284 = scmp.ne.s32.totalorder %s269, %s283
      %p285 = scmp.eq.s32.totalorder %s24, 0
      %p286 = por %p284, %p285
      %s287 = ssub.s32 %s25, %s44
      %s288 = ssub.s32 %s26, %s40
      %s289 = sor.u32 %s287, %s288
      %p290 = scmp.eq.s32.totalorder %s289, 0
      %s292 = sadd.s32 %s291, 1
      %s293 = scalar_select %p290, %s291, %s292
      %p296 = pneg %p290
      %p297 = scmp.eq.s32.totalorder %s18, 1
      %p298 = por %p296, %p297
      %p299 = scmp.ne.s32.totalorder %s291, %s294
      %p300 = scmp.eq.s32.totalorder %s18, 0
      %p301 = por %p299, %p300
      %p302 = scmp.ne.s32.totalorder %s291, %s294
      %p303 = scmp.eq.s32.totalorder %s23, 1
      %p304 = por %p302, %p303
      %p305 = scmp.ne.s32.totalorder %s294, %s295
      %p306 = scmp.eq.s32.totalorder %s23, 0
      %p307 = por %p305, %p306
      %p308 = scmp.ne.s32.totalorder %s294, %s295
      %p309 = scmp.eq.s32.totalorder %s24, 1
      %p310 = por %p308, %p309
      %p312 = scmp.ne.s32.totalorder %s295, %s311
      %p313 = scmp.eq.s32.totalorder %s24, 0
      %p314 = por %p312, %p313
      %p315 = scmp.le.s32.totalorder 1, %s18
      %p316 = scmp.lt.s32.totalorder %s18, 3
      %p317 = pnand %p315, %p316
      %p318 = pneg %p317
      // Predicated region
      $region9: #{_p_losses_device.1} parent=5 // pred_check
        _
      $region10: #{_p_losses_device.1} parent=5 // pred_check_branch
        %320 = sbr.rel (%p317) target = $region12
      $region11: #{_p_losses_device.1} parent=5 // pred_region
        %s321 = ssub.s32 %s18, 1
        // Predicated region
        $region13: #{_p_losses_device.1} parent=11 // pred_check
          %p322 = pneg %p58
        $region14: #{_p_losses_device.1} parent=11 // pred_check_branch
          %324 = sbr.rel (%p322) target = $region16
        $region15: #{_p_losses_device.1} parent=11 // pred_region
          %s326 = ssub.s32 16, 16
          %327 = vsyncadd [#allocation3], %s326
          %s329 = sshll.u32 %s0, 4
          %s330 = int_to_ptr.vmem [resolvable:$true] %s329
          %332 = dma.vmem_to_smem %s330, 16, [#allocation2], [#allocation3]
        $region16: #{_p_losses_device.1} parent=11 // pred_fallthru
          _
        // Predicated region
        $region17: #{_p_losses_device.1} parent=11 // pred_check
          %p333 = pneg %p79
        $region18: #{_p_losses_device.1} parent=11 // pred_check_branch
          %335 = sbr.rel (%p333) target = $region20
        $region19: #{_p_losses_device.1} parent=11 // pred_region
          %s337 = ssub.s32 16, 16
          %338 = vsyncadd [#allocation5], %s337
          %s340 = sshll.u32 %s1, 4
          %s341 = int_to_ptr.vmem [resolvable:$true] %s340
          %343 = dma.vmem_to_smem %s341, 16, [#allocation4], [#allocation5]
        $region20: #{_p_losses_device.1} parent=11 // pred_fallthru
          _
        // Predicated region
        $region21: #{_p_losses_device.1} parent=11 // pred_check
          %p344 = pneg %p190
        $region22: #{_p_losses_device.1} parent=11 // pred_check_branch
          %346 = sbr.rel (%p344) target = $region24
        $region23: #{_p_losses_device.1} parent=11 // pred_region
          _
        $region24: #{_p_losses_device.1} parent=11 // pred_fallthru
          _
        // Predicated region
        $region25: #{_p_losses_device.1} parent=11 // pred_check
          %p347 = pneg %p211
        $region26: #{_p_losses_device.1} parent=11 // pred_check_branch
          %349 = sbr.rel (%p347) target = $region28
        $region27: #{_p_losses_device.1} parent=11 // pred_region
          _
        $region28: #{_p_losses_device.1} parent=11 // pred_fallthru
          _
        // Predicated region
        $region29: #{_p_losses_device.1} parent=11 // pred_check
          %p350 = pneg %p258
        $region30: #{_p_losses_device.1} parent=11 // pred_check_branch
          %352 = sbr.rel (%p350) target = $region32
        $region31: #{_p_losses_device.1} parent=11 // pred_region
          _
        $region32: #{_p_losses_device.1} parent=11 // pred_fallthru
          _
        // Predicated region
        $region33: #{_p_losses_device.1} parent=11 // pred_check
          %p353 = pneg %p279
        $region34: #{_p_losses_device.1} parent=11 // pred_check_branch
          %355 = sbr.rel (%p353) target = $region36
        $region35: #{_p_losses_device.1} parent=11 // pred_region
          _
        $region36: #{_p_losses_device.1} parent=11 // pred_fallthru
          _
      $region12: #{_p_losses_device.1} parent=5 // pred_fallthru
        _
      %p356 = scmp.lt.s32.totalorder %s18, 2
      // Predicated region
      $region37: #{_p_losses_device.1} parent=5 // pred_check
        %p357 = pneg %p356
      $region38: #{_p_losses_device.1} parent=5 // pred_check_branch
        %359 = sbr.rel (%p357) target = $region40
      $region39: #{_p_losses_device.1} parent=5 // pred_region
        // Predicated region
        $region41: #{_p_losses_device.1} parent=39 // pred_check
          %p360 = pneg %p103
        $region42: #{_p_losses_device.1} parent=39 // pred_check_branch
          %362 = sbr.rel (%p360) target = $region44
        $region43: #{_p_losses_device.1} parent=39 // pred_region
          %s363 = sadd.s32 %s26, %s27
          %s364 = smul.u32 2, %s363
          %p365 = scmp.lt.s32.totalorder %s25, 1
          %s366 = scalar_select %p365, %s25, 1
          %p367 = scmp.lt.s32.totalorder %s364, 1
          %s368 = scalar_select %p367, %s364, 1
          %s369 = smul.addr %s366, 2
          %s370 = sadd.s32 %s368, %s369
          %s371 = smul.addr %s370, 4
          %s372 = scalar_lea.vmem %s2, %s371
          %s373 = sadd.s32 %s26, %s27
          %s374 = smul.u32 2, %s373
        $region44: #{_p_losses_device.1} parent=39 // pred_fallthru
          _
        // Predicated region
        $region45: #{_p_losses_device.1} parent=39 // pred_check
          %p375 = pneg %p133
        $region46: #{_p_losses_device.1} parent=39 // pred_check_branch
          %377 = sbr.rel (%p375) target = $region48
        $region47: #{_p_losses_device.1} parent=39 // pred_region
          %s378 = sadd.s32 %s26, %s27
          %s379 = smul.u32 2, %s378
          %p380 = scmp.lt.s32.totalorder %s25, 1
          %s381 = scalar_select %p380, %s25, 1
          %p382 = scmp.lt.s32.totalorder %s379, 1
          %s383 = scalar_select %p382, %s379, 1
          %s384 = smul.addr %s381, 2
          %s385 = sadd.s32 %s383, %s384
          %s386 = smul.addr %s385, 4
          %s387 = scalar_lea.vmem %s3, %s386
          %s388 = sadd.s32 %s26, %s27
          %s389 = smul.u32 2, %s388
        $region48: #{_p_losses_device.1} parent=39 // pred_fallthru
          _
        // Predicated region
        $region49: #{_p_losses_device.1} parent=39 // pred_check
          %p390 = pneg %p163
        $region50: #{_p_losses_device.1} parent=39 // pred_check_branch
          %392 = sbr.rel (%p390) target = $region52
        $region51: #{_p_losses_device.1} parent=39 // pred_region
          %s393 = sadd.s32 %s26, %s27
          %s394 = smul.u32 2, %s393
          %p395 = scmp.lt.s32.totalorder %s25, 1
          %s396 = scalar_select %p395, %s25, 1
          %p397 = scmp.lt.s32.totalorder %s394, 1
          %s398 = scalar_select %p397, %s394, 1
          %s399 = smul.addr %s396, 2
          %s400 = sadd.s32 %s398, %s399
          %s401 = smul.addr %s400, 4
          %s402 = scalar_lea.vmem %s4, %s401
          %s403 = sadd.s32 %s26, %s27
          %s404 = smul.u32 2, %s403
        $region52: #{_p_losses_device.1} parent=39 // pred_fallthru
          _
        // Predicated region
        $region53: #{_p_losses_device.1} parent=39 // pred_check
          %p405 = pneg %p231
        $region54: #{_p_losses_device.1} parent=39 // pred_check_branch
          %407 = sbr.rel (%p405) target = $region56
        $region55: #{_p_losses_device.1} parent=39 // pred_region
          %p408 = scmp.lt.s32.totalorder %s25, 1
          %s409 = scalar_select %p408, %s25, 1
          %s410 = smul.addr %s409, 4
          %s411 = smul.addr %s410, 8
          %s412 = scalar_lea.vmem %s7, %s411
        $region56: #{_p_losses_device.1} parent=39 // pred_fallthru
          _
      $region40: #{_p_losses_device.1} parent=5 // pred_fallthru
        _
      %p413 = scmp.le.s32.totalorder 1, %s18
      %p414 = scmp.lt.s32.totalorder %s18, 3
      %p415 = pnand %p413, %p414
      %p416 = pneg %p415
      // Predicated region
      $region57: #{_p_losses_device.1} parent=5 // pred_check
        _
      $region58: #{_p_losses_device.1} parent=5 // pred_check_branch
        %418 = sbr.rel (%p415) target = $region60
      $region59: #{_p_losses_device.1} parent=5 // pred_region
        %s419 = ssub.s32 %s18, 1
        // Predicated region
        $region61: #{_p_losses_device.1} parent=59 // pred_check
          %p420 = pneg %p58
        $region62: #{_p_losses_device.1} parent=59 // pred_check_branch
          %422 = sbr.rel (%p420) target = $region64
        $region63: #{_p_losses_device.1} parent=59 // pred_region
          %423 = dma.done [#allocation3], 16
        $region64: #{_p_losses_device.1} parent=59 // pred_fallthru
          _
        // Predicated region
        $region65: #{_p_losses_device.1} parent=59 // pred_check
          %p424 = pneg %p79
        $region66: #{_p_losses_device.1} parent=59 // pred_check_branch
          %426 = sbr.rel (%p424) target = $region68
        $region67: #{_p_losses_device.1} parent=59 // pred_region
          %427 = dma.done [#allocation5], 16
        $region68: #{_p_losses_device.1} parent=59 // pred_fallthru
          _
        %428 = sfence
        %p429 = pneg %p58
        %p430 = pneg %p55
        %p431 = pneg %p79
        %p432 = pneg %p76
        %s433 = sadd.s32 %s29, %s30
        %s434 = smul.u32 2, %s433
        %p435 = scmp.lt.s32.totalorder %s28, 1
        %s436 = scalar_select %p435, %s28, 1
        %p437 = scmp.lt.s32.totalorder %s434, 1
        %s438 = scalar_select %p437, %s434, 1
        %s439 = smul.addr %s436, 2
        %s440 = sadd.s32 %s438, %s439
        %s441 = smul.addr %s440, 4
        %s442 = scalar_lea.vmem %s2, %s441
        %p443 = pneg %p109
        %p444 = pneg %p106
        %s445 = sadd.s32 %s29, %s30
        %s446 = smul.u32 2, %s445
        %p447 = scmp.lt.s32.totalorder %s28, 1
        %s448 = scalar_select %p447, %s28, 1
        %p449 = scmp.lt.s32.totalorder %s446, 1
        %s450 = scalar_select %p449, %s446, 1
        %s451 = smul.addr %s448, 2
        %s452 = sadd.s32 %s450, %s451
        %s453 = smul.addr %s452, 4
        %s454 = scalar_lea.vmem %s3, %s453
        %p455 = pneg %p139
        %p456 = pneg %p136
        %s457 = sadd.s32 %s29, %s30
        %s458 = smul.u32 2, %s457
        %p459 = scmp.lt.s32.totalorder %s28, 1
        %s460 = scalar_select %p459, %s28, 1
        %p461 = scmp.lt.s32.totalorder %s458, 1
        %s462 = scalar_select %p461, %s458, 1
        %s463 = smul.addr %s460, 2
        %s464 = sadd.s32 %s462, %s463
        %s465 = smul.addr %s464, 4
        %s466 = scalar_lea.vmem %s4, %s465
        %p467 = pneg %p169
        %p468 = pneg %p166
        %p469 = pneg %p190
        %p470 = pneg %p187
        %p471 = pneg %p211
        %p472 = pneg %p208
        %p473 = scmp.lt.s32.totalorder %s28, 1
        %s474 = scalar_select %p473, %s28, 1
        %s475 = smul.addr %s474, 4
        %s476 = smul.addr %s475, 8
        %s477 = scalar_lea.vmem %s7, %s476
        %p478 = pneg %p237
        %p479 = pneg %p234
        %p480 = pneg %p258
        %p481 = pneg %p255
        %p482 = pneg %p279
        %p483 = pneg %p276
        %p484 = pneg %p307
        %p485 = pneg %p304
        %p486 = scmp.lt.s32.totalorder %s28, 1
        %s487 = scalar_select %p486, %s28, 1
        %p488 = scmp.lt.s32.totalorder %s29, 0
        %s489 = scalar_select %p488, %s29, 0
        %s490 = sadd.s32 %s489, %s487
        %s491 = smul.addr %s490, 8
        %s492 = scalar_lea.vmem %s10, %s491
        %s493 = sadd.s32 %s29, %s30
        %s494 = smul.u32 2, %s493
        %p495 = scmp.lt.s32.totalorder %s28, 1
        %s496 = scalar_select %p495, %s28, 1
        %p497 = scmp.lt.s32.totalorder %s494, 1
        %s498 = scalar_select %p497, %s494, 1
        %s499 = smul.addr %s496, 2
        %s500 = sadd.s32 %s498, %s499
        %s501 = smul.addr %s500, 4
        %s502 = scalar_lea.vmem %s2, %s501
        %s503 = sadd.s32 %s29, %s30
        %s504 = smul.u32 2, %s503
        %s505 = sadd.s32 %s29, %s30
        %s506 = smul.u32 2, %s505
        %p507 = scmp.lt.s32.totalorder %s28, 1
        %s508 = scalar_select %p507, %s28, 1
        %p509 = scmp.lt.s32.totalorder %s506, 1
        %s510 = scalar_select %p509, %s506, 1
        %s511 = smul.addr %s508, 2
        %s512 = sadd.s32 %s510, %s511
        %s513 = smul.addr %s512, 4
        %s514 = scalar_lea.vmem %s3, %s513
        %s515 = sadd.s32 %s29, %s30
        %s516 = smul.u32 2, %s515
        %s517 = sadd.s32 %s29, %s30
        %s518 = smul.u32 2, %s517
        %p519 = scmp.lt.s32.totalorder %s28, 1
        %s520 = scalar_select %p519, %s28, 1
        %p521 = scmp.lt.s32.totalorder %s518, 1
        %s522 = scalar_select %p521, %s518, 1
        %s523 = smul.addr %s520, 2
        %s524 = sadd.s32 %s522, %s523
        %s525 = smul.addr %s524, 4
        %s526 = scalar_lea.vmem %s4, %s525
        %s527 = sadd.s32 %s29, %s30
        %s528 = smul.u32 2, %s527
        %p529 = scmp.lt.s32.totalorder %s28, 1
        %s530 = scalar_select %p529, %s28, 1
        %s531 = smul.addr %s530, 4
        %s532 = smul.addr %s531, 8
        %s533 = scalar_lea.vmem %s7, %s532
        %p534 = scmp.lt.s32.totalorder %s28, 1
        %s535 = scalar_select %p534, %s28, 1
        %p536 = scmp.lt.s32.totalorder %s29, 0
        %s537 = scalar_select %p536, %s29, 0
        %s538 = sadd.s32 %s537, %s535
        %s539 = smul.addr %s538, 8
        %s540 = scalar_lea.vmem %s10, %s539
        %p542 = scmp.eq.s32.totalorder %s30, 0
        // Predicated region
        $region69: #{_p_losses_device.1} parent=59 // pred_check
          %p543 = pneg %p542
        $region70: #{_p_losses_device.1} parent=59 // pred_check_branch
          %545 = sbr.rel (%p543) target = $region72
        $region71: #{_p_losses_device.1} parent=59 // pred_region
          %546 = vst [vmem:[%s540] sm:$0xff] 0.0
        $region72: #{_p_losses_device.1} parent=59 // pred_fallthru
          _
        %s547 = sld [smem:[#allocation2 + %s28]]
        %s548 = sld [smem:[#allocation4 + %s28]]
        %v549 = vld [vmem:[%s502] sm:$0x77]
        %v550 = vld [vmem:[%s514] sm:$0x77]
        %v551 = vld [vmem:[%s526] sm:$0x77]
        %v552 = vstv %s547
        %v553 = vmul.f32 %v552, %v549
        %v554 = vstv %s548
        %v555 = vmul.f32 %v554, %v551
        %v556 = vadd.f32 %v553, %v555
        %v557 = vld [vmem:[%s5] sm:$0xf]
        %v558 = vld [vmem:[%s5 + $0x4] sm:$0xf]
        %v559 = vld [vmem:[%s5 + $0x8] sm:$0xf]
        %v560 = vld [vmem:[%s5 + $0xc] sm:$0xf]
        %v562 = vcombine.high %v550, %v550
        %v564 = vpack.c.bf16 %v550, %v550
        %v565 = vpack.c.bf16 %v562, %v562
        %v566 = vld [vmem:[%s6] sm:$0xf]
        %v567 = vld [vmem:[%s6 + $0x4] sm:$0xf]
        %v568 = vld [vmem:[%s6 + $0x8] sm:$0xf]
        %v569 = vld [vmem:[%s6 + $0xc] sm:$0xf]
        %v571 = vcombine.high %v556, %v556
        %v573 = vpack.c.bf16 %v556, %v556
        %v574 = vpack.c.bf16 %v571, %v571
        %v579 = vunpack.c.l.b16 %v566
        %v580 = vunpack.c.l.b16 %v567
        %v581 = vunpack.c.l.b16 %v568
        %v582 = vunpack.c.l.b16 %v569
        %v583 = vpack.c.b16 %v580, %v579
        %v584 = vpack.c.b16 %v582, %v581
        %vm585 = vcmask 23552
        %v587 = vsel %vm585, %v583, 0
        %v590 = vsel %vm585, %v584, 0
        %vm592 = vcmask 1040384
        %vm593 = vcmask 1041408
        %v594 = vsel %vm592, 4294967295, 65535
        %v595 = vsel %vm593, %v594, 0
        %v597 = vand.u32 %v573, %v595
        %v600 = vand.u32 %v574, %v595
        %602 = vmatprep.subr.bf16.mxu0 0
        %603 = vmatpush1.bf16.msra.mxu0 0
        %604 = vmatprep.subr.bf16.mxu0 0
        %605 = vmatpush1.bf16.msra.mxu0 0
        %606 = vmatprep.subr.bf16.mxu0 0
        %607 = vmatpush1.bf16.msra.mxu0 0
        %608 = vmatprep.subr.bf16.mxu0 0
        %609 = vmatpush1.bf16.msra.mxu0 0
        %610 = vmatprep.subr.bf16.mxu0 0
        %611 = vmatpush1.bf16.msra.mxu0 0
        %612 = vmatprep.subr.bf16.mxu0 0
        %613 = vmatpush1.bf16.msra.mxu0 0
        %614 = vmatprep.subr.bf16.mxu0 0
        %615 = vmatpush1.bf16.msra.mxu0 0
        %616 = vmatprep.subr.bf16.mxu0 %v600
        %617 = vmatpush1.bf16.msra.mxu0 %v597
        %618 = vmatprep.subr.bf16.mxu0 0
        %619 = vmatpush2.bf16.msra.mxu0 0
        %620 = vmatprep.subr.bf16.mxu0 0
        %621 = vmatpush2.bf16.msra.mxu0 0
        %622 = vmatprep.subr.bf16.mxu0 0
        %623 = vmatpush2.bf16.msra.mxu0 0
        %624 = vmatprep.subr.bf16.mxu0 0
        %625 = vmatpush2.bf16.msra.mxu0 0
        %626 = vmatprep.subr.bf16.mxu0 0
        %627 = vmatpush2.bf16.msra.mxu0 0
        %628 = vmatprep.subr.bf16.mxu0 0
        %629 = vmatpush2.bf16.msra.mxu0 0
        %630 = vmatprep.subr.bf16.mxu0 0
        %631 = vmatpush2.bf16.msra.mxu0 0
        %632 = vmatprep.subr.bf16.mxu0 0
        %633 = vmatpush2.bf16.msra.mxu0 0
        %634 = vmatprep.mubr.bf16.mxu0 0
        %635 = vmatmul.mubr.bf16.gmra.mxu0 %v587
        %v636 = vpop.f32.mrf.mxu0
        %v637 = vadd.f32 0.0, %v636
        %v638 = vpop.f32.mrf.mxu0
        %v639 = vadd.f32 0.0, %v638
        %v640 = vpop.f32.mrf.mxu0
        %v641 = vadd.f32 0.0, %v640
        %v642 = vpop.f32.mrf.mxu0
        %v643 = vadd.f32 0.0, %v642
        %644 = vmatprep.mubr.bf16.mxu0 0
        %645 = vmatmul.mubr.bf16.gmra.mxu0 %v590
        %v646 = vpop.f32.mrf.mxu0
        %v647 = vadd.f32 0.0, %v646
        %v648 = vpop.f32.mrf.mxu0
        %v649 = vadd.f32 0.0, %v648
        %v650 = vpop.f32.mrf.mxu0
        %v651 = vadd.f32 0.0, %v650
        %v652 = vpop.f32.mrf.mxu0
        %v653 = vadd.f32 0.0, %v652
        %654 = vdwg.mxu0
        %v659 = vunpack.c.l.b16 %v557
        %v660 = vunpack.c.l.b16 %v558
        %v661 = vunpack.c.l.b16 %v559
        %v662 = vunpack.c.l.b16 %v560
        %v663 = vpack.c.b16 %v660, %v659
        %v664 = vpack.c.b16 %v662, %v661
        %v666 = vsel %vm585, %v663, 0
        %v669 = vsel %vm585, %v664, 0
        %v672 = vand.u32 %v564, %v595
        %v675 = vand.u32 %v565, %v595
        %677 = vmatprep.subr.bf16.mxu0 0
        %678 = vmatpush1.bf16.msra.mxu0 0
        %679 = vmatprep.subr.bf16.mxu0 0
        %680 = vmatpush1.bf16.msra.mxu0 0
        %681 = vmatprep.subr.bf16.mxu0 0
        %682 = vmatpush1.bf16.msra.mxu0 0
        %683 = vmatprep.subr.bf16.mxu0 0
        %684 = vmatpush1.bf16.msra.mxu0 0
        %685 = vmatprep.subr.bf16.mxu0 0
        %686 = vmatpush1.bf16.msra.mxu0 0
        %687 = vmatprep.subr.bf16.mxu0 0
        %688 = vmatpush1.bf16.msra.mxu0 0
        %689 = vmatprep.subr.bf16.mxu0 0
        %690 = vmatpush1.bf16.msra.mxu0 0
        %691 = vmatprep.subr.bf16.mxu0 %v675
        %692 = vmatpush1.bf16.msra.mxu0 %v672
        %693 = vmatprep.subr.bf16.mxu0 0
        %694 = vmatpush2.bf16.msra.mxu0 0
        %695 = vmatprep.subr.bf16.mxu0 0
        %696 = vmatpush2.bf16.msra.mxu0 0
        %697 = vmatprep.subr.bf16.mxu0 0
        %698 = vmatpush2.bf16.msra.mxu0 0
        %699 = vmatprep.subr.bf16.mxu0 0
        %700 = vmatpush2.bf16.msra.mxu0 0
        %701 = vmatprep.subr.bf16.mxu0 0
        %702 = vmatpush2.bf16.msra.mxu0 0
        %703 = vmatprep.subr.bf16.mxu0 0
        %704 = vmatpush2.bf16.msra.mxu0 0
        %705 = vmatprep.subr.bf16.mxu0 0
        %706 = vmatpush2.bf16.msra.mxu0 0
        %707 = vmatprep.subr.bf16.mxu0 0
        %708 = vmatpush2.bf16.msra.mxu0 0
        %709 = vmatprep.mubr.bf16.mxu0 0
        %710 = vmatmul.mubr.bf16.gmra.mxu0 %v666
        %v711 = vpop.f32.mrf.mxu0
        %v712 = vadd.f32 %v637, %v711
        %v713 = vpop.f32.mrf.mxu0
        %v714 = vadd.f32 %v639, %v713
        %v715 = vpop.f32.mrf.mxu0
        %v716 = vadd.f32 %v641, %v715
        %v717 = vpop.f32.mrf.mxu0
        %v718 = vadd.f32 %v643, %v717
        %719 = vmatprep.mubr.bf16.mxu0 0
        %720 = vmatmul.mubr.bf16.gmra.mxu0 %v669
        %v721 = vpop.f32.mrf.mxu0
        %v722 = vadd.f32 %v647, %v721
        %v723 = vpop.f32.mrf.mxu0
        %v724 = vadd.f32 %v649, %v723
        %v725 = vpop.f32.mrf.mxu0
        %v726 = vadd.f32 %v651, %v725
        %v727 = vpop.f32.mrf.mxu0
        %v728 = vadd.f32 %v653, %v727
        %729 = vdwg.mxu0
        %v730 = vld [vmem:[%s533] sm:$0xff]
        %v731 = vld [vmem:[%s533 + $0x8] sm:$0xff]
        %v732 = vld [vmem:[%s533 + $0x10] sm:$0xff]
        %v733 = vld [vmem:[%s533 + $0x18] sm:$0xff]
        %735 = vset.pattern.permute.xlu0 0
        %736 = vperm.xlu0 %735, %v730
        %v737 = vpop.permute.xlu0 %736
        %740 = vset.pattern.permute.xlu0 0
        %741 = vperm.xlu0 %740, %v731
        %v742 = vpop.permute.xlu0 %741
        %745 = vset.pattern.permute.xlu0 0
        %746 = vperm.xlu0 %745, %v732
        %v747 = vpop.permute.xlu0 %746
        %750 = vset.pattern.permute.xlu0 0
        %751 = vperm.xlu0 %750, %v733
        %v752 = vpop.permute.xlu0 %751
        %v754 = vadd.f32 %v712, %v737
        %v755 = vadd.f32 %v714, %v737
        %v756 = vadd.f32 %v716, %v742
        %v757 = vadd.f32 %v718, %v742
        %v758 = vadd.f32 %v722, %v747
        %v759 = vadd.f32 %v724, %v747
        %v760 = vadd.f32 %v726, %v752
        %v761 = vadd.f32 %v728, %v752
        %v762 = vmax.f32 %v754, 0.0
        %v763 = vmax.f32 %v755, 0.0
        %v764 = vmax.f32 %v756, 0.0
        %v765 = vmax.f32 %v757, 0.0
        %v766 = vmax.f32 %v758, 0.0
        %v767 = vmax.f32 %v759, 0.0
        %v768 = vmax.f32 %v760, 0.0
        %v769 = vmax.f32 %v761, 0.0
        %v770 = vld [vmem:[%s8] sm:$0x3]
        %v771 = vpack.c.bf16 %v764, %v762
        %v772 = vpack.c.bf16 %v765, %v763
        %v773 = vpack.c.bf16 %v768, %v766
        %v774 = vpack.c.bf16 %v769, %v767
        %v775 = vld [vmem:[%s9] sm:$0x7]
        %777 = vset.pattern.permute.xlu0 0
        %778 = vperm.xlu0 %777, %v775
        %v779 = vpop.permute.xlu0 %778
        %vm781 = vcmask 261120
        %v783 = vsel %vm781, %v770, 0
        %785 = vmatprep.subr.bf16.mxu0 0
        %786 = vmatpush1.bf16.msra.mxu0 0
        %787 = vmatprep.subr.bf16.mxu0 0
        %788 = vmatpush1.bf16.msra.mxu0 0
        %789 = vmatprep.subr.bf16.mxu0 0
        %790 = vmatpush1.bf16.msra.mxu0 0
        %791 = vmatprep.subr.bf16.mxu0 0
        %792 = vmatpush1.bf16.msra.mxu0 0
        %793 = vmatprep.subr.bf16.mxu0 0
        %794 = vmatpush1.bf16.msra.mxu0 0
        %795 = vmatprep.subr.bf16.mxu0 0
        %796 = vmatpush1.bf16.msra.mxu0 0
        %797 = vmatprep.subr.bf16.mxu0 %v774
        %798 = vmatpush1.bf16.msra.mxu0 %v773
        %799 = vmatprep.subr.bf16.mxu0 %v772
        %800 = vmatpush1.bf16.msra.mxu0 %v771
        %801 = vmatprep.subr.bf16.mxu0 0
        %802 = vmatpush2.bf16.msra.mxu0 0
        %803 = vmatprep.subr.bf16.mxu0 0
        %804 = vmatpush2.bf16.msra.mxu0 0
        %805 = vmatprep.subr.bf16.mxu0 0
        %806 = vmatpush2.bf16.msra.mxu0 0
        %807 = vmatprep.subr.bf16.mxu0 0
        %808 = vmatpush2.bf16.msra.mxu0 0
        %809 = vmatprep.subr.bf16.mxu0 0
        %810 = vmatpush2.bf16.msra.mxu0 0
        %811 = vmatprep.subr.bf16.mxu0 0
        %812 = vmatpush2.bf16.msra.mxu0 0
        %813 = vmatprep.subr.bf16.mxu0 0
        %814 = vmatpush2.bf16.msra.mxu0 0
        %815 = vmatprep.subr.bf16.mxu0 0
        %816 = vmatpush2.bf16.msra.mxu0 0
        %817 = vmatprep.mubr.bf16.mxu0 0
        %818 = vmatmul.mubr.bf16.gmra.mxu0 %v783
        %v819 = vpop.f32.mrf.mxu0
        %v820 = vadd.f32 %v779, %v819
        %v821 = vpop.f32.mrf.mxu0
        %v822 = vadd.f32 %v779, %v821
        %v823 = vpop.f32.mrf.mxu0
        %v824 = vpop.f32.mrf.mxu0
        %825 = vdwg.mxu0
        %v828 = vcombine.low %v820, %v822
        %v830 = vsub.f32 %v551, %v828
        %v831 = vand.u32 2147483647, %v830
        %v832 = vld [vmem:[%s540] sm:$0xff]
        %v834 = vcombine.high %v831, %v831
        %vm836 = vcmask 1042432
        %v837 = vsel %vm836, %v831, 0.0
        %v838 = vsel %vm836, %v834, 0.0
        %v839 = vadd.f32 %v837, %v838
        %840 = vadd.xlane.f32.xlu0 %v839
        %v841 = vpop.xlane.xlu0 %840
        %v842 = vrot.slane %v841, 4
        %v843 = vadd.f32 %v841, %v842
        %v844 = vrot.slane %v843, 2
        %v845 = vadd.f32 %v843, %v844
        %v846 = vrot.slane %v845, 1
        %v847 = vadd.f32 %v845, %v846
        %s848 = vtos %v847
        %v849 = vstv %s848
        %v850 = vadd.f32 %v832, %v849
        %851 = vst [vmem:[%s540] sm:$0xff] %v850
        %p852 = scmp.lt.s32.totalorder %s28, 1
        %s853 = scalar_select %p852, %s28, 1
        %p854 = scmp.lt.s32.totalorder %s29, 0
        %s855 = scalar_select %p854, %s29, 0
        %s856 = sadd.s32 %s855, %s853
        %s857 = smul.addr %s856, 8
        %s858 = scalar_lea.vmem %s10, %s857
        // Predicated region
        $region73: #{_p_losses_device.1} parent=59 // pred_check
          %p859 = pneg %p304
        $region74: #{_p_losses_device.1} parent=59 // pred_check_branch
          %861 = sbr.rel (%p859) target = $region76
        $region75: #{_p_losses_device.1} parent=59 // pred_region
          _
        $region76: #{_p_losses_device.1} parent=59 // pred_fallthru
          _
      $region60: #{_p_losses_device.1} parent=5 // pred_fallthru
        _
      %p862 = scmp.le.s32.totalorder 2, %s18
      // Predicated region
      $region77: #{_p_losses_device.1} parent=5 // pred_check
        %p863 = pneg %p862
      $region78: #{_p_losses_device.1} parent=5 // pred_check_branch
        %865 = sbr.rel (%p863) target = $region80
      $region79: #{_p_losses_device.1} parent=5 // pred_region
        %s866 = ssub.s32 %s18, 2
        // Predicated region
        $region81: #{_p_losses_device.1} parent=79 // pred_check
          %p867 = pneg %p310
        $region82: #{_p_losses_device.1} parent=79 // pred_check_branch
          %869 = sbr.rel (%p867) target = $region84
        $region83: #{_p_losses_device.1} parent=79 // pred_region
          %p870 = scmp.lt.s32.totalorder %s31, 1
          %s871 = scalar_select %p870, %s31, 1
          %p872 = scmp.lt.s32.totalorder %s32, 0
          %s873 = scalar_select %p872, %s32, 0
          %s874 = sadd.s32 %s873, %s871
          %s875 = smul.addr %s874, 8
          %s876 = scalar_lea.vmem %s10, %s875
        $region84: #{_p_losses_device.1} parent=79 // pred_fallthru
          _
      $region80: #{_p_losses_device.1} parent=5 // pred_fallthru
        _
    $region6: #{_p_losses_device.1} parent=1 // loop_footer
      %s22 = sadd.s32 1, %s18
    $region7: #{_p_losses_device.1} parent=1 // loop_footer_branch
      %17 = sbr.rel target = $region3
    $region8: #{_p_losses_device.1} parent=1 // loop_exit
      _
    %877 = vsyncpa [#allocation3], 1
    %s878 = scalar_lea.sflag [#allocation3], 1
    %879 = vsyncpa %s878, 1
    %880 = vsyncpa [#allocation5], 1

</llo_original>
